<compile_context>
chip_gen: v7x
topology: tpu7x:2x2x1
jax: 0.10.0
libtpu: 0.0.40
codegen_flags: <defaults>
</compile_context>

<pallas_src>
import math

import jax
import jax.numpy as jnp
from jax.experimental import pallas as pl
from jax.experimental.pallas import tpu as pltpu


def _mlp_kernel(w1_ref, b1_ref, w2_ref, b2_ref, x_ref, o_ref):
    """Feature-major MLP forward on one batch tile.

    x_ref : (2, 8, T) VMEM  -- features on dim 0, batch on (sublane, lane).
    o_ref : (2, 8, T) VMEM
    w1_ref: (6,)  SMEM   -- fc1 weight, flattened (in=2, out=3) row-major.
    b1_ref: (3,)  SMEM
    w2_ref: (6,)  SMEM   -- fc2 weight, flattened (in=3, out=2) row-major.
    b2_ref: (2,)  SMEM
    """
    x0 = x_ref[0]  # (8, T) full-sublane operand
    x1 = x_ref[1]  # (8, T)

    # fc1 + sigmoid: scalar-broadcast VPU FMAs (K=2 is far too small for MXU),
    # sigmoid goes to the EUP slot.
    h0 = jax.nn.sigmoid(w1_ref[0] * x0 + w1_ref[3] * x1 + b1_ref[0])
    h1 = jax.nn.sigmoid(w1_ref[1] * x0 + w1_ref[4] * x1 + b1_ref[1])
    h2 = jax.nn.sigmoid(w1_ref[2] * x0 + w1_ref[5] * x1 + b1_ref[2])

    # fc2 logits (K=3), again plain VPU broadcast FMAs.
    z0 = h0 * w2_ref[0] + h1 * w2_ref[2] + h2 * w2_ref[4] + b2_ref[0]
    z1 = h0 * w2_ref[1] + h1 * w2_ref[3] + h2 * w2_ref[5] + b2_ref[1]

    # 2-class softmax == sigmoid of the logit difference.
    p1 = jax.nn.sigmoid(z1 - z0)

    # Direct full-sublane row stores (unmasked vst, no relayout/concat).
    o_ref[0] = 1.0 - p1
    o_ref[1] = p1


def _mlp_reference(x, w1_t, b1, w2_t, b2):
    """Plain-JAX forward (also used as the small-batch fallback)."""
    h = jax.nn.sigmoid(x @ w1_t + b1)
    return jax.nn.softmax(h @ w2_t + b2, axis=-1)


def mlp_forward(x, w1_t, b1, w2_t, b2, *, block_lanes=8192, min_pallas_n=2048):
    """Forward pass of the 2-3-2 MLP.

    x    : (N, 2) float32 (torch layout: batch-major).
    w1_t : (2, 3) float32 -- fc1.weight transposed to (in, out).
    b1   : (3,)   float32
    w2_t : (3, 2) float32 -- fc2.weight transposed to (in, out).
    b2   : (2,)   float32
    Returns (N, 2) float32 softmax probabilities.
    """
    n = x.shape[0]
    xf = x.astype(jnp.float32)
    w1f = w1_t.astype(jnp.float32)
    b1f = b1.astype(jnp.float32)
    w2f = w2_t.astype(jnp.float32)
    b2f = b2.astype(jnp.float32)

    # Small-batch fallback: kernel launch + layout plumbing would dominate.
    if n < min_pallas_n:
        return _mlp_reference(xf, w1f, b1f, w2f, b2f)

    # Pad N only up to a multiple of 8*128 so L = N_pad/8 is lane-aligned;
    # pad + transpose + reshape fuse into the single (unavoidable) layout pass.
    n_pad = ((n + 1023) // 1024) * 1024
    lanes = n_pad // 8
    block = min(block_lanes, lanes)  # both are multiples of 128
    grid = pl.cdiv(lanes, block)     # ragged last block handled by Pallas

    x_fm = jnp.pad(xf, ((0, n_pad - n), (0, 0))).T.reshape(2, 8, lanes)

    w1_flat = w1f.reshape(-1)  # (6,) row-major (in, out)
    w2_flat = w2f.reshape(-1)  # (6,)

    smem = pl.BlockSpec(memory_space=pltpu.MemorySpace.SMEM)
    cost = pl.CostEstimate(
        flops=26 * n_pad,
        transcendentals=4 * n_pad,
        bytes_accessed=4 * 4 * n_pad + 4 * (6 + 3 + 6 + 2),
    )

    out_fm = pl.pallas_call(
        _mlp_kernel,
        out_shape=jax.ShapeDtypeStruct((2, 8, lanes), jnp.float32),
        grid=(grid,),
        in_specs=[
            smem, smem, smem, smem,
            pl.BlockSpec((2, 8, block), lambda i: (0, 0, i)),
        ],
        out_specs=pl.BlockSpec((2, 8, block), lambda i: (0, 0, i)),
        compiler_params=pltpu.CompilerParams(
            dimension_semantics=("parallel",),
        ),
        cost_estimate=cost,
    )(w1_flat, b1f, w2_flat, b2f, x_fm)

    # Undo the (2, 8, L) packing; one layout pass out.
    return out_fm.reshape(2, n_pad)[:, :n].T


def _xavier_uniform(key, shape_out_in):
    # Matches torch.nn.init.xavier_uniform_ (gain=1) on a (out, in) weight.
    fan_out, fan_in = shape_out_in
    bound = math.sqrt(6.0 / (fan_in + fan_out))
    return jax.random.uniform(key, shape_out_in, jnp.float32, -bound, bound)


if __name__ == "__main__":
    key = jax.random.PRNGKey(0)
    k_x, k_w1, k_b1, k_w2, k_b2 = jax.random.split(key, 5)

    # Deterministic parameter init (PyTorch weight layout is (out, in)).
    w1_torch = _xavier_uniform(k_w1, (3, 2))                       # fc1.weight
    b1 = jax.random.uniform(k_b1, (3,), jnp.float32, -0.5, 0.5)    # fc1.bias
    w2_torch = _xavier_uniform(k_w2, (2, 3))                       # fc2.weight
    b2 = jax.random.uniform(k_b2, (2,), jnp.float32, -0.5, 0.5)    # fc2.bias

    # --- Pallas path: batch large enough to exercise the kernel (full tile). ---
    N = 8192
    x = jax.random.normal(k_x, (N, 2), dtype=jnp.float32)
    out = jax.block_until_ready(mlp_forward(x, w1_torch.T, b1, w2_torch.T, b2))

    h_ref = jax.nn.sigmoid(x @ w1_torch.T + b1)
    ref = jax.nn.softmax(h_ref @ w2_torch.T + b2, axis=-1)
    assert out.shape == (N, 2)
    assert jnp.allclose(out, ref, atol=1e-5), "mismatch vs reference (N=8192)"
    assert jnp.allclose(jnp.sum(out, axis=-1), 1.0, atol=1e-6)

    # --- Pallas path with a ragged/padded batch. ---
    N2 = 3000
    x2 = jax.random.normal(jax.random.PRNGKey(1), (N2, 2), dtype=jnp.float32)
    out2 = jax.block_until_ready(mlp_forward(x2, w1_torch.T, b1, w2_torch.T, b2))
    ref2 = jax.nn.softmax(
        jax.nn.sigmoid(x2 @ w1_torch.T + b1) @ w2_torch.T + b2, axis=-1)
    assert jnp.allclose(out2, ref2, atol=1e-5), "mismatch vs reference (N=3000)"

    # --- Small-batch fallback path (pure jnp, no kernel launch). ---
    N3 = 8
    x3 = jax.random.normal(jax.random.PRNGKey(2), (N3, 2), dtype=jnp.float32)
    out3 = jax.block_until_ready(mlp_forward(x3, w1_torch.T, b1, w2_torch.T, b2))
    ref3 = jax.nn.softmax(
        jax.nn.sigmoid(x3 @ w1_torch.T + b1) @ w2_torch.T + b2, axis=-1)
    assert jnp.allclose(out3, ref3, atol=1e-5), "mismatch vs reference (N=8)"

    print("KERNEL_OK")
</pallas_src>

<mosaic_0001>
module attributes {stable_mosaic.version = 11 : i64} {
  func.func @_mlp_kernel(%arg0: i32, %arg1: memref<6xf32, #tpu.memory_space<smem>>, %arg2: memref<3xf32, #tpu.memory_space<smem>>, %arg3: memref<6xf32, #tpu.memory_space<smem>>, %arg4: memref<2xf32, #tpu.memory_space<smem>>, %arg5: memref<2x8x1024xf32, #tpu.memory_space<vmem>>, %arg6: memref<2x8x1024xf32, #tpu.memory_space<vmem>>) attributes {dimension_semantics = [#tpu.dimension_semantics<parallel>], iteration_bounds = array<i64: 1>, scalar_prefetch = 0 : i64, scratch_operands = 0 : i64, tpu.core_type = #tpu.core_type<tc>, window_params = [{transform_indices = @transform_0, window_bounds = array<i64: 6>}, {transform_indices = @transform_1, window_bounds = array<i64: 3>}, {transform_indices = @transform_2, window_bounds = array<i64: 6>}, {transform_indices = @transform_3, window_bounds = array<i64: 2>}, {transform_indices = @transform_4, window_bounds = array<i64: 2, 8, 1024>}, {transform_indices = @transform_5, window_bounds = array<i64: 2, 8, 1024>}]} {
    %c0 = arith.constant 0 : index
    %c0_0 = arith.constant 0 : index
    %c0_1 = arith.constant 0 : index
    %0 = vector.load %arg5[%c0, %c0_0, %c0_1] : memref<2x8x1024xf32, #tpu.memory_space<vmem>>, vector<1x8x1024xf32>
    %1 = vector.shape_cast %0 : vector<1x8x1024xf32> to vector<8x1024xf32>
    %c1 = arith.constant 1 : index
    %c0_2 = arith.constant 0 : index
    %c0_3 = arith.constant 0 : index
    %2 = vector.load %arg5[%c1, %c0_2, %c0_3] : memref<2x8x1024xf32, #tpu.memory_space<vmem>>, vector<1x8x1024xf32>
    %3 = vector.shape_cast %2 : vector<1x8x1024xf32> to vector<8x1024xf32>
    %c0_4 = arith.constant 0 : index
    %4 = memref.load %arg1[%c0_4] : memref<6xf32, #tpu.memory_space<smem>>
    %5 = vector.broadcast %4 : f32 to vector<8x1024xf32>
    %6 = arith.mulf %5, %1 : vector<8x1024xf32>
    %c3 = arith.constant 3 : index
    %7 = memref.load %arg1[%c3] : memref<6xf32, #tpu.memory_space<smem>>
    %8 = vector.broadcast %7 : f32 to vector<8x1024xf32>
    %9 = arith.mulf %8, %3 : vector<8x1024xf32>
    %10 = arith.addf %6, %9 : vector<8x1024xf32>
    %c0_5 = arith.constant 0 : index
    %11 = memref.load %arg2[%c0_5] : memref<3xf32, #tpu.memory_space<smem>>
    %12 = vector.broadcast %11 : f32 to vector<8x1024xf32>
    %13 = arith.addf %10, %12 : vector<8x1024xf32>
    %14 = arith.negf %13 : vector<8x1024xf32>
    %15 = math.exp %14 : vector<8x1024xf32>
    %cst = arith.constant 1.000000e+00 : f32
    %16 = vector.broadcast %cst : f32 to vector<8x1024xf32>
    %17 = arith.addf %16, %15 : vector<8x1024xf32>
    %18 = arith.divf %16, %17 : vector<8x1024xf32>
    %c1_6 = arith.constant 1 : index
    %19 = memref.load %arg1[%c1_6] : memref<6xf32, #tpu.memory_space<smem>>
    %20 = vector.broadcast %19 : f32 to vector<8x1024xf32>
    %21 = arith.mulf %20, %1 : vector<8x1024xf32>
    %c4 = arith.constant 4 : index
    %22 = memref.load %arg1[%c4] : memref<6xf32, #tpu.memory_space<smem>>
    %23 = vector.broadcast %22 : f32 to vector<8x1024xf32>
    %24 = arith.mulf %23, %3 : vector<8x1024xf32>
    %25 = arith.addf %21, %24 : vector<8x1024xf32>
    %c1_7 = arith.constant 1 : index
    %26 = memref.load %arg2[%c1_7] : memref<3xf32, #tpu.memory_space<smem>>
    %27 = vector.broadcast %26 : f32 to vector<8x1024xf32>
    %28 = arith.addf %25, %27 : vector<8x1024xf32>
    %29 = arith.negf %28 : vector<8x1024xf32>
    %30 = math.exp %29 : vector<8x1024xf32>
    %cst_8 = arith.constant 1.000000e+00 : f32
    %31 = vector.broadcast %cst_8 : f32 to vector<8x1024xf32>
    %32 = arith.addf %31, %30 : vector<8x1024xf32>
    %33 = arith.divf %31, %32 : vector<8x1024xf32>
    %c2 = arith.constant 2 : index
    %34 = memref.load %arg1[%c2] : memref<6xf32, #tpu.memory_space<smem>>
    %35 = vector.broadcast %34 : f32 to vector<8x1024xf32>
    %36 = arith.mulf %35, %1 : vector<8x1024xf32>
    %c5 = arith.constant 5 : index
    %37 = memref.load %arg1[%c5] : memref<6xf32, #tpu.memory_space<smem>>
    %38 = vector.broadcast %37 : f32 to vector<8x1024xf32>
    %39 = arith.mulf %38, %3 : vector<8x1024xf32>
    %40 = arith.addf %36, %39 : vector<8x1024xf32>
    %c2_9 = arith.constant 2 : index
    %41 = memref.load %arg2[%c2_9] : memref<3xf32, #tpu.memory_space<smem>>
    %42 = vector.broadcast %41 : f32 to vector<8x1024xf32>
    %43 = arith.addf %40, %42 : vector<8x1024xf32>
    %44 = arith.negf %43 : vector<8x1024xf32>
    %45 = math.exp %44 : vector<8x1024xf32>
    %cst_10 = arith.constant 1.000000e+00 : f32
    %46 = vector.broadcast %cst_10 : f32 to vector<8x1024xf32>
    %47 = arith.addf %46, %45 : vector<8x1024xf32>
    %48 = arith.divf %46, %47 : vector<8x1024xf32>
    %c0_11 = arith.constant 0 : index
    %49 = memref.load %arg3[%c0_11] : memref<6xf32, #tpu.memory_space<smem>>
    %50 = vector.broadcast %49 : f32 to vector<8x1024xf32>
    %51 = arith.mulf %18, %50 : vector<8x1024xf32>
    %c2_12 = arith.constant 2 : index
    %52 = memref.load %arg3[%c2_12] : memref<6xf32, #tpu.memory_space<smem>>
    %53 = vector.broadcast %52 : f32 to vector<8x1024xf32>
    %54 = arith.mulf %33, %53 : vector<8x1024xf32>
    %55 = arith.addf %51, %54 : vector<8x1024xf32>
    %c4_13 = arith.constant 4 : index
    %56 = memref.load %arg3[%c4_13] : memref<6xf32, #tpu.memory_space<smem>>
    %57 = vector.broadcast %56 : f32 to vector<8x1024xf32>
    %58 = arith.mulf %48, %57 : vector<8x1024xf32>
    %59 = arith.addf %55, %58 : vector<8x1024xf32>
    %c0_14 = arith.constant 0 : index
    %60 = memref.load %arg4[%c0_14] : memref<2xf32, #tpu.memory_space<smem>>
    %61 = vector.broadcast %60 : f32 to vector<8x1024xf32>
    %62 = arith.addf %59, %61 : vector<8x1024xf32>
    %c1_15 = arith.constant 1 : index
    %63 = memref.load %arg3[%c1_15] : memref<6xf32, #tpu.memory_space<smem>>
    %64 = vector.broadcast %63 : f32 to vector<8x1024xf32>
    %65 = arith.mulf %18, %64 : vector<8x1024xf32>
    %c3_16 = arith.constant 3 : index
    %66 = memref.load %arg3[%c3_16] : memref<6xf32, #tpu.memory_space<smem>>
    %67 = vector.broadcast %66 : f32 to vector<8x1024xf32>
    %68 = arith.mulf %33, %67 : vector<8x1024xf32>
    %69 = arith.addf %65, %68 : vector<8x1024xf32>
    %c5_17 = arith.constant 5 : index
    %70 = memref.load %arg3[%c5_17] : memref<6xf32, #tpu.memory_space<smem>>
    %71 = vector.broadcast %70 : f32 to vector<8x1024xf32>
    %72 = arith.mulf %48, %71 : vector<8x1024xf32>
    %73 = arith.addf %69, %72 : vector<8x1024xf32>
    %c1_18 = arith.constant 1 : index
    %74 = memref.load %arg4[%c1_18] : memref<2xf32, #tpu.memory_space<smem>>
    %75 = vector.broadcast %74 : f32 to vector<8x1024xf32>
    %76 = arith.addf %73, %75 : vector<8x1024xf32>
    %77 = arith.subf %76, %62 : vector<8x1024xf32>
    %78 = arith.negf %77 : vector<8x1024xf32>
    %79 = math.exp %78 : vector<8x1024xf32>
    %cst_19 = arith.constant 1.000000e+00 : f32
    %80 = vector.broadcast %cst_19 : f32 to vector<8x1024xf32>
    %81 = arith.addf %80, %79 : vector<8x1024xf32>
    %82 = arith.divf %80, %81 : vector<8x1024xf32>
    %cst_20 = arith.constant 1.000000e+00 : f32
    %83 = vector.broadcast %cst_20 : f32 to vector<8x1024xf32>
    %84 = arith.subf %83, %82 : vector<8x1024xf32>
    %c0_21 = arith.constant 0 : index
    %c0_22 = arith.constant 0 : index
    %c0_23 = arith.constant 0 : index
    %85 = vector.load %arg6[%c0_21, %c0_22, %c0_23] : memref<2x8x1024xf32, #tpu.memory_space<vmem>>, vector<1x8x1024xf32>
    %86 = vector.shape_cast %85 : vector<1x8x1024xf32> to vector<8x1024xf32>
    %87 = vector.shape_cast %84 : vector<8x1024xf32> to vector<1x8x1024xf32>
    tpu.vector_store %arg6[%c0_21, %c0_22, %c0_23], %87 {strides = array<i32>} : memref<2x8x1024xf32, #tpu.memory_space<vmem>>, vector<1x8x1024xf32>,
    %c1_24 = arith.constant 1 : index
    %c0_25 = arith.constant 0 : index
    %c0_26 = arith.constant 0 : index
    %88 = vector.load %arg6[%c1_24, %c0_25, %c0_26] : memref<2x8x1024xf32, #tpu.memory_space<vmem>>, vector<1x8x1024xf32>
    %89 = vector.shape_cast %88 : vector<1x8x1024xf32> to vector<8x1024xf32>
    %90 = vector.shape_cast %82 : vector<8x1024xf32> to vector<1x8x1024xf32>
    tpu.vector_store %arg6[%c1_24, %c0_25, %c0_26], %90 {strides = array<i32>} : memref<2x8x1024xf32, #tpu.memory_space<vmem>>, vector<1x8x1024xf32>,
    return
  }
  func.func @transform_0(%arg0: i32) -> i32 {
    %c0_i32 = arith.constant 0 : i32
    %c0_i32_0 = arith.constant 0 : i32
    return %c0_i32 : i32
  }
  func.func @transform_1(%arg0: i32) -> i32 {
    %c0_i32 = arith.constant 0 : i32
    %c0_i32_0 = arith.constant 0 : i32
    return %c0_i32 : i32
  }
  func.func @transform_2(%arg0: i32) -> i32 {
    %c0_i32 = arith.constant 0 : i32
    %c0_i32_0 = arith.constant 0 : i32
    return %c0_i32 : i32
  }
  func.func @transform_3(%arg0: i32) -> i32 {
    %c0_i32 = arith.constant 0 : i32
    %c0_i32_0 = arith.constant 0 : i32
    return %c0_i32 : i32
  }
  func.func @transform_4(%arg0: i32) -> (i32, i32, i32) {
    %c0_i32 = arith.constant 0 : i32
    %c0_i32_0 = arith.constant 0 : i32
    %c0_i32_1 = arith.constant 0 : i32
    return %c0_i32, %c0_i32_0, %arg0 : i32, i32, i32
  }
  func.func @transform_5(%arg0: i32) -> (i32, i32, i32) {
    %c0_i32 = arith.constant 0 : i32
    %c0_i32_0 = arith.constant 0 : i32
    %c0_i32_1 = arith.constant 0 : i32
    return %c0_i32, %c0_i32_0, %arg0 : i32, i32, i32
  }
}

</mosaic_0001>

<llo_original>
// kernel: tpu_custom_call.1
$region0: #{tpu_custom_call.1}
  #allocation0 [shape = 'u32[]', space=smem, size = 0x4, offset = 0x4, fixed_abs, tag = 'smem constant byte address 0x4 - core index']
  #allocation1 [shape = 'u32[144,128]{1,0:T(1,128)}', space=vmem, size = 0x12000, scoped, tag = 'internal scratch']
  %s0 = inlined_call_operand.hbm [shape: f32[6], index: 0, kind: input, shape index: {}]
  %s1 = inlined_call_operand.vmem [shape: f32[3], index: 1, kind: input, shape index: {}]
  %s2 = inlined_call_operand.vmem [shape: f32[6], index: 2, kind: input, shape index: {}]
  %s3 = inlined_call_operand.vmem [shape: f32[2], index: 3, kind: input, shape index: {}]
  %s4 = inlined_call_operand.hbm [shape: f32[2,8,1024], index: 4, kind: input, shape index: {}]
  %s5 = inlined_call_operand.hbm [shape: f32[2,8,1024], index: 5, kind: output, shape index: {}]
  %s6 = sld [smem:[#allocation0]]
  $region50: #{tpu_custom_call.1} parent=0
    _
  %s8 = ssub.s32 1, %s6
  %s9 = scalar_select 0, %s8, %s6
  $region1: #{tpu_custom_call.1} parent=0
    #allocation2 [shape = 'u8[512]{0}', space=smem, size = 0x200, scoped, tag = 'input window, operand 0, single buffered']
    #allocation3 [shape = 's32[1]{0}', space=sflag, size = 0x4, scoped, tag = 'scoped memory for tpu_custom_call.1']
    #allocation4 [shape = 's32[1]{0}', space=sflag, size = 0x4, scoped, tag = 'scoped memory for tpu_custom_call.1']
    #allocation5 [shape = 's32[1]{0}', space=sflag, size = 0x4, scoped, tag = 'scoped memory for tpu_custom_call.1']
    #allocation6 [shape = 's32[1]{0}', space=sflag, size = 0x4, scoped, tag = 'scoped memory for tpu_custom_call.1']
    #allocation7 [shape = 'u8[512]{0}', space=smem, size = 0x200, scoped, tag = 'input window, operand 1, single buffered']
    #allocation8 [shape = 'u8[512]{0}', space=smem, size = 0x200, scoped, tag = 'input window, operand 2, single buffered']
    #allocation9 [shape = 's32[1]{0}', space=sflag, size = 0x4, scoped, tag = 'scoped memory for tpu_custom_call.1']
    #allocation10 [shape = 'u8[512]{0}', space=smem, size = 0x200, scoped, tag = 'input window, operand 3, single buffered']
    #allocation11 [shape = 'u8[65536]{0}', space=vmem, size = 0x10000, scoped, tag = 'input window, operand 4, single buffered']
    #allocation12 [shape = 'u8[65536]{0}', space=vmem, size = 0x10000, scoped, tag = 'output window, operand 0, single buffered']
    %10 = vsyncpa [#allocation5], 0
    %11 = vsyncpa [#allocation6], 0
    %12 = vsyncpa [#allocation9], 0
    %13 = vsyncpa [#allocation3], 0
    %14 = vsyncpa [#allocation4], 0
    // Predicated region
    $region2: #{tpu_custom_call.1} parent=1 // pred_check
      _
    $region3: #{tpu_custom_call.1} parent=1 // pred_check_branch
      %16 = sbr.rel (0) target = $region5
    $region4: #{tpu_custom_call.1} parent=1 // pred_region
      %s18 = ssub.s32 16, 16
      %19 = vsyncadd [#allocation5], %s18
      %22 = dma.hbm_to_smem %s0, 16, [#allocation2], [#allocation5]
    $region5: #{tpu_custom_call.1} parent=1 // pred_fallthru
      _
    // Predicated region
    $region6: #{tpu_custom_call.1} parent=1 // pred_check
      _
    $region7: #{tpu_custom_call.1} parent=1 // pred_check_branch
      %24 = sbr.rel (0) target = $region9
    $region8: #{tpu_custom_call.1} parent=1 // pred_region
      %s26 = ssub.s32 16, 16
      %27 = vsyncadd [#allocation6], %s26
      %s29 = sshll.u32 %s1, 4
      %s30 = int_to_ptr.vmem [resolvable:$true] %s29
      %32 = dma.vmem_to_smem %s30, 16, [#allocation7], [#allocation6]
    $region9: #{tpu_custom_call.1} parent=1 // pred_fallthru
      _
    // Predicated region
    $region10: #{tpu_custom_call.1} parent=1 // pred_check
      _
    $region11: #{tpu_custom_call.1} parent=1 // pred_check_branch
      %34 = sbr.rel (0) target = $region13
    $region12: #{tpu_custom_call.1} parent=1 // pred_region
      %s36 = ssub.s32 16, 16
      %37 = vsyncadd [#allocation9], %s36
      %s39 = sshll.u32 %s2, 4
      %s40 = int_to_ptr.vmem [resolvable:$true] %s39
      %42 = dma.vmem_to_smem %s40, 16, [#allocation8], [#allocation9]
    $region13: #{tpu_custom_call.1} parent=1 // pred_fallthru
      _
    // Predicated region
    $region14: #{tpu_custom_call.1} parent=1 // pred_check
      _
    $region15: #{tpu_custom_call.1} parent=1 // pred_check_branch
      %44 = sbr.rel (0) target = $region17
    $region16: #{tpu_custom_call.1} parent=1 // pred_region
      %s46 = ssub.s32 16, 16
      %47 = vsyncadd [#allocation9], %s46
      %s49 = sshll.u32 %s3, 4
      %s50 = int_to_ptr.vmem [resolvable:$true] %s49
      %52 = dma.vmem_to_smem %s50, 16, [#allocation10], [#allocation9]
    $region17: #{tpu_custom_call.1} parent=1 // pred_fallthru
      _
    // Predicated region
    $region18: #{tpu_custom_call.1} parent=1 // pred_check
      _
    $region19: #{tpu_custom_call.1} parent=1 // pred_check_branch
      %54 = sbr.rel (0) target = $region21
    $region20: #{tpu_custom_call.1} parent=1 // pred_region
      %s56 = ssub.s32 2048, 2048
      %57 = vsyncadd [#allocation3], %s56
      %s58 = sshll.u32 [#allocation11], 4
      %s59 = int_to_ptr.vmem [resolvable:$true] %s58
      %64 = dma.hbm_to_vmem [thread:$0]  %s4, 2048, %s59, [#allocation3], 1024, 1024, 64
    $region21: #{tpu_custom_call.1} parent=1 // pred_fallthru
      _
    // Predicated region
    $region22: #{tpu_custom_call.1} parent=1 // pred_check
      _
    $region23: #{tpu_custom_call.1} parent=1 // pred_check_branch
      %66 = sbr.rel (0) target = $region25
    $region24: #{tpu_custom_call.1} parent=1 // pred_region
      %67 = dma.done [#allocation5], 16
    $region25: #{tpu_custom_call.1} parent=1 // pred_fallthru
      _
    // Predicated region
    $region26: #{tpu_custom_call.1} parent=1 // pred_check
      _
    $region27: #{tpu_custom_call.1} parent=1 // pred_check_branch
      %69 = sbr.rel (0) target = $region29
    $region28: #{tpu_custom_call.1} parent=1 // pred_region
      %70 = dma.done [#allocation6], 16
    $region29: #{tpu_custom_call.1} parent=1 // pred_fallthru
      _
    // Predicated region
    $region30: #{tpu_custom_call.1} parent=1 // pred_check
      _
    $region31: #{tpu_custom_call.1} parent=1 // pred_check_branch
      %72 = sbr.rel (0) target = $region33
    $region32: #{tpu_custom_call.1} parent=1 // pred_region
      %73 = dma.done [#allocation9], 16
    $region33: #{tpu_custom_call.1} parent=1 // pred_fallthru
      _
    // Predicated region
    $region34: #{tpu_custom_call.1} parent=1 // pred_check
      _
    $region35: #{tpu_custom_call.1} parent=1 // pred_check_branch
      %75 = sbr.rel (0) target = $region37
    $region36: #{tpu_custom_call.1} parent=1 // pred_region
      %76 = dma.done [#allocation9], 16
    $region37: #{tpu_custom_call.1} parent=1 // pred_fallthru
      _
    // Predicated region
    $region38: #{tpu_custom_call.1} parent=1 // pred_check
      _
    $region39: #{tpu_custom_call.1} parent=1 // pred_check_branch
      %78 = sbr.rel (0) target = $region41
    $region40: #{tpu_custom_call.1} parent=1 // pred_region
      %79 = dma.done [#allocation3], 2048
    $region41: #{tpu_custom_call.1} parent=1 // pred_fallthru
      _
    %80 = sfence
    %v81 = vld [vmem:[#allocation11] sm:$0xff]
    %v82 = vld [vmem:[#allocation11 + $0x8] sm:$0xff]
    %v83 = vld [vmem:[#allocation11 + $0x10] sm:$0xff]
    %v84 = vld [vmem:[#allocation11 + $0x18] sm:$0xff]
    %v85 = vld [vmem:[#allocation11 + $0x20] sm:$0xff]
    %v86 = vld [vmem:[#allocation11 + $0x28] sm:$0xff]
    %v87 = vld [vmem:[#allocation11 + $0x30] sm:$0xff]
    %v88 = vld [vmem:[#allocation11 + $0x38] sm:$0xff]
    %s89 = scalar_lea.vmem [#allocation11], 64
    %v90 = vld [vmem:[%s89] sm:$0xff]
    %v91 = vld [vmem:[%s89 + $0x8] sm:$0xff]
    %v92 = vld [vmem:[%s89 + $0x10] sm:$0xff]
    %v93 = vld [vmem:[%s89 + $0x18] sm:$0xff]
    %v94 = vld [vmem:[%s89 + $0x20] sm:$0xff]
    %v95 = vld [vmem:[%s89 + $0x28] sm:$0xff]
    %v96 = vld [vmem:[%s89 + $0x30] sm:$0xff]
    %v97 = vld [vmem:[%s89 + $0x38] sm:$0xff]
    %s98 = sld [smem:[#allocation2]]
    %v99 = vstv %s98
    %v100 = vmul.f32 %v99, %v81
    %v101 = vmul.f32 %v99, %v82
    %v102 = vmul.f32 %v99, %v83
    %v103 = vmul.f32 %v99, %v84
    %v104 = vmul.f32 %v99, %v85
    %v105 = vmul.f32 %v99, %v86
    %v106 = vmul.f32 %v99, %v87
    %v107 = vmul.f32 %v99, %v88
    %s108 = sld [smem:[#allocation2 + $0x3]]
    %v109 = vstv %s108
    %v110 = vmul.f32 %v109, %v90
    %v111 = vmul.f32 %v109, %v91
    %v112 = vmul.f32 %v109, %v92
    %v113 = vmul.f32 %v109, %v93
    %v114 = vmul.f32 %v109, %v94
    %v115 = vmul.f32 %v109, %v95
    %v116 = vmul.f32 %v109, %v96
    %v117 = vmul.f32 %v109, %v97
    %v118 = vadd.f32 %v100, %v110
    %v119 = vadd.f32 %v101, %v111
    %v120 = vadd.f32 %v102, %v112
    %v121 = vadd.f32 %v103, %v113
    %v122 = vadd.f32 %v104, %v114
    %v123 = vadd.f32 %v105, %v115
    %v124 = vadd.f32 %v106, %v116
    %v125 = vadd.f32 %v107, %v117
    %s126 = sld [smem:[#allocation7]]
    %v127 = vstv %s126
    %v128 = vadd.f32 %v118, %v127
    %v129 = vadd.f32 %v119, %v127
    %v130 = vadd.f32 %v120, %v127
    %v131 = vadd.f32 %v121, %v127
    %v132 = vadd.f32 %v122, %v127
    %v133 = vadd.f32 %v123, %v127
    %v134 = vadd.f32 %v124, %v127
    %v135 = vadd.f32 %v125, %v127
    %v136 = vxor.u32 %v128, 2147483648
    %v137 = vxor.u32 %v129, 2147483648
    %v138 = vxor.u32 %v130, 2147483648
    %v139 = vxor.u32 %v131, 2147483648
    %v140 = vxor.u32 %v132, 2147483648
    %v141 = vxor.u32 %v133, 2147483648
    %v142 = vxor.u32 %v134, 2147483648
    %v143 = vxor.u32 %v135, 2147483648
    %v144 = vmul.f32 %v136, 1.442695
    %v145 = vpow.pop %v144
    %v146 = vmul.f32 %v137, 1.442695
    %v147 = vpow.pop %v146
    %v148 = vmul.f32 %v138, 1.442695
    %v149 = vpow.pop %v148
    %v150 = vmul.f32 %v139, 1.442695
    %v151 = vpow.pop %v150
    %v152 = vmul.f32 %v140, 1.442695
    %v153 = vpow.pop %v152
    %v154 = vmul.f32 %v141, 1.442695
    %v155 = vpow.pop %v154
    %v156 = vmul.f32 %v142, 1.442695
    %v157 = vpow.pop %v156
    %v158 = vmul.f32 %v143, 1.442695
    %v159 = vpow.pop %v158
    %v160 = vadd.f32 %v145, 1.0
    %v161 = vadd.f32 %v147, 1.0
    %v162 = vadd.f32 %v149, 1.0
    %v163 = vadd.f32 %v151, 1.0
    %v164 = vadd.f32 %v153, 1.0
    %v165 = vadd.f32 %v155, 1.0
    %v166 = vadd.f32 %v157, 1.0
    %v167 = vadd.f32 %v159, 1.0
    %v168 = vrcp.pop %v160
    %v169 = vmul.f32 1.0, %v168
    %v170 = vrcp.pop %v161
    %v171 = vmul.f32 1.0, %v170
    %v172 = vrcp.pop %v162
    %v173 = vmul.f32 1.0, %v172
    %v174 = vrcp.pop %v163
    %v175 = vmul.f32 1.0, %v174
    %v176 = vrcp.pop %v164
    %v177 = vmul.f32 1.0, %v176
    %v178 = vrcp.pop %v165
    %v179 = vmul.f32 1.0, %v178
    %v180 = vrcp.pop %v166
    %v181 = vmul.f32 1.0, %v180
    %v182 = vrcp.pop %v167
    %v183 = vmul.f32 1.0, %v182
    %s184 = sld [smem:[#allocation2 + $0x1]]
    %v185 = vstv %s184
    %v186 = vmul.f32 %v185, %v81
    %v187 = vmul.f32 %v185, %v82
    %v188 = vmul.f32 %v185, %v83
    %v189 = vmul.f32 %v185, %v84
    %v190 = vmul.f32 %v185, %v85
    %v191 = vmul.f32 %v185, %v86
    %v192 = vmul.f32 %v185, %v87
    %v193 = vmul.f32 %v185, %v88
    %s194 = sld [smem:[#allocation2 + $0x4]]
    %v195 = vstv %s194
    %v196 = vmul.f32 %v195, %v90
    %v197 = vmul.f32 %v195, %v91
    %v198 = vmul.f32 %v195, %v92
    %v199 = vmul.f32 %v195, %v93
    %v200 = vmul.f32 %v195, %v94
    %v201 = vmul.f32 %v195, %v95
    %v202 = vmul.f32 %v195, %v96
    %v203 = vmul.f32 %v195, %v97
    %v204 = vadd.f32 %v186, %v196
    %v205 = vadd.f32 %v187, %v197
    %v206 = vadd.f32 %v188, %v198
    %v207 = vadd.f32 %v189, %v199
    %v208 = vadd.f32 %v190, %v200
    %v209 = vadd.f32 %v191, %v201
    %v210 = vadd.f32 %v192, %v202
    %v211 = vadd.f32 %v193, %v203
    %s212 = sld [smem:[#allocation7 + $0x1]]
    %v213 = vstv %s212
    %v214 = vadd.f32 %v204, %v213
    %v215 = vadd.f32 %v205, %v213
    %v216 = vadd.f32 %v206, %v213
    %v217 = vadd.f32 %v207, %v213
    %v218 = vadd.f32 %v208, %v213
    %v219 = vadd.f32 %v209, %v213
    %v220 = vadd.f32 %v210, %v213
    %v221 = vadd.f32 %v211, %v213
    %v222 = vxor.u32 %v214, 2147483648
    %v223 = vxor.u32 %v215, 2147483648
    %v224 = vxor.u32 %v216, 2147483648
    %v225 = vxor.u32 %v217, 2147483648
    %v226 = vxor.u32 %v218, 2147483648
    %v227 = vxor.u32 %v219, 2147483648
    %v228 = vxor.u32 %v220, 2147483648
    %v229 = vxor.u32 %v221, 2147483648
    %v230 = vmul.f32 %v222, 1.442695
    %v231 = vpow.pop %v230
    %v232 = vmul.f32 %v223, 1.442695
    %v233 = vpow.pop %v232
    %v234 = vmul.f32 %v224, 1.442695
    %v235 = vpow.pop %v234
    %v236 = vmul.f32 %v225, 1.442695
    %v237 = vpow.pop %v236
    %v238 = vmul.f32 %v226, 1.442695
    %v239 = vpow.pop %v238
    %v240 = vmul.f32 %v227, 1.442695
    %v241 = vpow.pop %v240
    %v242 = vmul.f32 %v228, 1.442695
    %v243 = vpow.pop %v242
    %v244 = vmul.f32 %v229, 1.442695
    %v245 = vpow.pop %v244
    %v246 = vadd.f32 %v231, 1.0
    %v247 = vadd.f32 %v233, 1.0
    %v248 = vadd.f32 %v235, 1.0
    %v249 = vadd.f32 %v237, 1.0
    %v250 = vadd.f32 %v239, 1.0
    %v251 = vadd.f32 %v241, 1.0
    %v252 = vadd.f32 %v243, 1.0
    %v253 = vadd.f32 %v245, 1.0
    %v254 = vrcp.pop %v246
    %v255 = vmul.f32 1.0, %v254
    %v256 = vrcp.pop %v247
    %v257 = vmul.f32 1.0, %v256
    %v258 = vrcp.pop %v248
    %v259 = vmul.f32 1.0, %v258
    %v260 = vrcp.pop %v249
    %v261 = vmul.f32 1.0, %v260
    %v262 = vrcp.pop %v250
    %v263 = vmul.f32 1.0, %v262
    %v264 = vrcp.pop %v251
    %v265 = vmul.f32 1.0, %v264
    %v266 = vrcp.pop %v252
    %v267 = vmul.f32 1.0, %v266
    %v268 = vrcp.pop %v253
    %v269 = vmul.f32 1.0, %v268
    %s270 = sld [smem:[#allocation2 + $0x2]]
    %v271 = vstv %s270
    %v272 = vmul.f32 %v271, %v81
    %v273 = vmul.f32 %v271, %v82
    %v274 = vmul.f32 %v271, %v83
    %v275 = vmul.f32 %v271, %v84
    %v276 = vmul.f32 %v271, %v85
    %v277 = vmul.f32 %v271, %v86
    %v278 = vmul.f32 %v271, %v87
    %v279 = vmul.f32 %v271, %v88
    %s280 = sld [smem:[#allocation2 + $0x5]]
    %v281 = vstv %s280
    %v282 = vmul.f32 %v281, %v90
    %v283 = vmul.f32 %v281, %v91
    %v284 = vmul.f32 %v281, %v92
    %v285 = vmul.f32 %v281, %v93
    %v286 = vmul.f32 %v281, %v94
    %v287 = vmul.f32 %v281, %v95
    %v288 = vmul.f32 %v281, %v96
    %v289 = vmul.f32 %v281, %v97
    %v290 = vadd.f32 %v272, %v282
    %v291 = vadd.f32 %v273, %v283
    %v292 = vadd.f32 %v274, %v284
    %v293 = vadd.f32 %v275, %v285
    %v294 = vadd.f32 %v276, %v286
    %v295 = vadd.f32 %v277, %v287
    %v296 = vadd.f32 %v278, %v288
    %v297 = vadd.f32 %v279, %v289
    %s298 = sld [smem:[#allocation7 + $0x2]]
    %v299 = vstv %s298
    %v300 = vadd.f32 %v290, %v299
    %v301 = vadd.f32 %v291, %v299
    %v302 = vadd.f32 %v292, %v299
    %v303 = vadd.f32 %v293, %v299
    %v304 = vadd.f32 %v294, %v299
    %v305 = vadd.f32 %v295, %v299
    %v306 = vadd.f32 %v296, %v299
    %v307 = vadd.f32 %v297, %v299
    %v308 = vxor.u32 %v300, 2147483648
    %v309 = vxor.u32 %v301, 2147483648
    %v310 = vxor.u32 %v302, 2147483648
    %v311 = vxor.u32 %v303, 2147483648
    %v312 = vxor.u32 %v304, 2147483648
    %v313 = vxor.u32 %v305, 2147483648
    %v314 = vxor.u32 %v306, 2147483648
    %v315 = vxor.u32 %v307, 2147483648
    %v316 = vmul.f32 %v308, 1.442695
    %v317 = vpow.pop %v316
    %v318 = vmul.f32 %v309, 1.442695
    %v319 = vpow.pop %v318
    %v320 = vmul.f32 %v310, 1.442695
    %v321 = vpow.pop %v320
    %v322 = vmul.f32 %v311, 1.442695
    %v323 = vpow.pop %v322
    %v324 = vmul.f32 %v312, 1.442695
    %v325 = vpow.pop %v324
    %v326 = vmul.f32 %v313, 1.442695
    %v327 = vpow.pop %v326
    %v328 = vmul.f32 %v314, 1.442695
    %v329 = vpow.pop %v328
    %v330 = vmul.f32 %v315, 1.442695
    %v331 = vpow.pop %v330
    %v332 = vadd.f32 %v317, 1.0
    %v333 = vadd.f32 %v319, 1.0
    %v334 = vadd.f32 %v321, 1.0
    %v335 = vadd.f32 %v323, 1.0
    %v336 = vadd.f32 %v325, 1.0
    %v337 = vadd.f32 %v327, 1.0
    %v338 = vadd.f32 %v329, 1.0
    %v339 = vadd.f32 %v331, 1.0
    %v340 = vrcp.pop %v332
    %v341 = vmul.f32 1.0, %v340
    %v342 = vrcp.pop %v333
    %v343 = vmul.f32 1.0, %v342
    %v344 = vrcp.pop %v334
    %v345 = vmul.f32 1.0, %v344
    %v346 = vrcp.pop %v335
    %v347 = vmul.f32 1.0, %v346
    %v348 = vrcp.pop %v336
    %v349 = vmul.f32 1.0, %v348
    %v350 = vrcp.pop %v337
    %v351 = vmul.f32 1.0, %v350
    %v352 = vrcp.pop %v338
    %v353 = vmul.f32 1.0, %v352
    %v354 = vrcp.pop %v339
    %v355 = vmul.f32 1.0, %v354
    %s356 = sld [smem:[#allocation8]]
    %v357 = vstv %s356
    %v358 = vmul.f32 %v169, %v357
    %v359 = vmul.f32 %v171, %v357
    %v360 = vmul.f32 %v173, %v357
    %v361 = vmul.f32 %v175, %v357
    %v362 = vmul.f32 %v177, %v357
    %v363 = vmul.f32 %v179, %v357
    %v364 = vmul.f32 %v181, %v357
    %v365 = vmul.f32 %v183, %v357
    %s366 = sld [smem:[#allocation8 + $0x2]]
    %v367 = vstv %s366
    %v368 = vmul.f32 %v255, %v367
    %v369 = vmul.f32 %v257, %v367
    %v370 = vmul.f32 %v259, %v367
    %v371 = vmul.f32 %v261, %v367
    %v372 = vmul.f32 %v263, %v367
    %v373 = vmul.f32 %v265, %v367
    %v374 = vmul.f32 %v267, %v367
    %v375 = vmul.f32 %v269, %v367
    %v376 = vadd.f32 %v358, %v368
    %v377 = vadd.f32 %v359, %v369
    %v378 = vadd.f32 %v360, %v370
    %v379 = vadd.f32 %v361, %v371
    %v380 = vadd.f32 %v362, %v372
    %v381 = vadd.f32 %v363, %v373
    %v382 = vadd.f32 %v364, %v374
    %v383 = vadd.f32 %v365, %v375
    %s384 = sld [smem:[#allocation8 + $0x4]]
    %v385 = vstv %s384
    %v386 = vmul.f32 %v341, %v385
    %v387 = vmul.f32 %v343, %v385
    %v388 = vmul.f32 %v345, %v385
    %v389 = vmul.f32 %v347, %v385
    %v390 = vmul.f32 %v349, %v385
    %v391 = vmul.f32 %v351, %v385
    %v392 = vmul.f32 %v353, %v385
    %v393 = vmul.f32 %v355, %v385
    %v394 = vadd.f32 %v376, %v386
    %v395 = vadd.f32 %v377, %v387
    %v396 = vadd.f32 %v378, %v388
    %v397 = vadd.f32 %v379, %v389
    %v398 = vadd.f32 %v380, %v390
    %v399 = vadd.f32 %v381, %v391
    %v400 = vadd.f32 %v382, %v392
    %v401 = vadd.f32 %v383, %v393
    %s402 = sld [smem:[#allocation10]]
    %v403 = vstv %s402
    %v404 = vadd.f32 %v394, %v403
    %v405 = vadd.f32 %v395, %v403
    %v406 = vadd.f32 %v396, %v403
    %v407 = vadd.f32 %v397, %v403
    %v408 = vadd.f32 %v398, %v403
    %v409 = vadd.f32 %v399, %v403
    %v410 = vadd.f32 %v400, %v403
    %v411 = vadd.f32 %v401, %v403
    %s412 = sld [smem:[#allocation8 + $0x1]]
    %v413 = vstv %s412
    %v414 = vmul.f32 %v169, %v413
    %v415 = vmul.f32 %v171, %v413
    %v416 = vmul.f32 %v173, %v413
    %v417 = vmul.f32 %v175, %v413
    %v418 = vmul.f32 %v177, %v413
    %v419 = vmul.f32 %v179, %v413
    %v420 = vmul.f32 %v181, %v413
    %v421 = vmul.f32 %v183, %v413
    %s422 = sld [smem:[#allocation8 + $0x3]]
    %v423 = vstv %s422
    %v424 = vmul.f32 %v255, %v423
    %v425 = vmul.f32 %v257, %v423
    %v426 = vmul.f32 %v259, %v423
    %v427 = vmul.f32 %v261, %v423
    %v428 = vmul.f32 %v263, %v423
    %v429 = vmul.f32 %v265, %v423
    %v430 = vmul.f32 %v267, %v423
    %v431 = vmul.f32 %v269, %v423
    %v432 = vadd.f32 %v414, %v424
    %v433 = vadd.f32 %v415, %v425
    %v434 = vadd.f32 %v416, %v426
    %v435 = vadd.f32 %v417, %v427
    %v436 = vadd.f32 %v418, %v428
    %v437 = vadd.f32 %v419, %v429
    %v438 = vadd.f32 %v420, %v430
    %v439 = vadd.f32 %v421, %v431
    %s440 = sld [smem:[#allocation8 + $0x5]]
    %v441 = vstv %s440
    %v442 = vmul.f32 %v341, %v441
    %v443 = vmul.f32 %v343, %v441
    %v444 = vmul.f32 %v345, %v441
    %v445 = vmul.f32 %v347, %v441
    %v446 = vmul.f32 %v349, %v441
    %v447 = vmul.f32 %v351, %v441
    %v448 = vmul.f32 %v353, %v441
    %v449 = vmul.f32 %v355, %v441
    %v450 = vadd.f32 %v432, %v442
    %v451 = vadd.f32 %v433, %v443
    %v452 = vadd.f32 %v434, %v444
    %v453 = vadd.f32 %v435, %v445
    %v454 = vadd.f32 %v436, %v446
    %v455 = vadd.f32 %v437, %v447
    %v456 = vadd.f32 %v438, %v448
    %v457 = vadd.f32 %v439, %v449
    %s458 = sld [smem:[#allocation10 + $0x1]]
    %v459 = vstv %s458
    %v460 = vadd.f32 %v450, %v459
    %v461 = vadd.f32 %v451, %v459
    %v462 = vadd.f32 %v452, %v459
    %v463 = vadd.f32 %v453, %v459
    %v464 = vadd.f32 %v454, %v459
    %v465 = vadd.f32 %v455, %v459
    %v466 = vadd.f32 %v456, %v459
    %v467 = vadd.f32 %v457, %v459
    %v468 = vsub.f32 %v460, %v404
    %v469 = vsub.f32 %v461, %v405
    %v470 = vsub.f32 %v462, %v406
    %v471 = vsub.f32 %v463, %v407
    %v472 = vsub.f32 %v464, %v408
    %v473 = vsub.f32 %v465, %v409
    %v474 = vsub.f32 %v466, %v410
    %v475 = vsub.f32 %v467, %v411
    %v476 = vxor.u32 %v468, 2147483648
    %v477 = vxor.u32 %v469, 2147483648
    %v478 = vxor.u32 %v470, 2147483648
    %v479 = vxor.u32 %v471, 2147483648
    %v480 = vxor.u32 %v472, 2147483648
    %v481 = vxor.u32 %v473, 2147483648
    %v482 = vxor.u32 %v474, 2147483648
    %v483 = vxor.u32 %v475, 2147483648
    %v484 = vmul.f32 %v476, 1.442695
    %v485 = vpow.pop %v484
    %v486 = vmul.f32 %v477, 1.442695
    %v487 = vpow.pop %v486
    %v488 = vmul.f32 %v478, 1.442695
    %v489 = vpow.pop %v488
    %v490 = vmul.f32 %v479, 1.442695
    %v491 = vpow.pop %v490
    %v492 = vmul.f32 %v480, 1.442695
    %v493 = vpow.pop %v492
    %v494 = vmul.f32 %v481, 1.442695
    %v495 = vpow.pop %v494
    %v496 = vmul.f32 %v482, 1.442695
    %v497 = vpow.pop %v496
    %v498 = vmul.f32 %v483, 1.442695
    %v499 = vpow.pop %v498
    %v500 = vadd.f32 %v485, 1.0
    %v501 = vadd.f32 %v487, 1.0
    %v502 = vadd.f32 %v489, 1.0
    %v503 = vadd.f32 %v491, 1.0
    %v504 = vadd.f32 %v493, 1.0
    %v505 = vadd.f32 %v495, 1.0
    %v506 = vadd.f32 %v497, 1.0
    %v507 = vadd.f32 %v499, 1.0
    %v508 = vrcp.pop %v500
    %v509 = vmul.f32 1.0, %v508
    %v510 = vrcp.pop %v501
    %v511 = vmul.f32 1.0, %v510
    %v512 = vrcp.pop %v502
    %v513 = vmul.f32 1.0, %v512
    %v514 = vrcp.pop %v503
    %v515 = vmul.f32 1.0, %v514
    %v516 = vrcp.pop %v504
    %v517 = vmul.f32 1.0, %v516
    %v518 = vrcp.pop %v505
    %v519 = vmul.f32 1.0, %v518
    %v520 = vrcp.pop %v506
    %v521 = vmul.f32 1.0, %v520
    %v522 = vrcp.pop %v507
    %v523 = vmul.f32 1.0, %v522
    %v524 = vsub.f32 1.0, %v509
    %v525 = vsub.f32 1.0, %v511
    %v526 = vsub.f32 1.0, %v513
    %v527 = vsub.f32 1.0, %v515
    %v528 = vsub.f32 1.0, %v517
    %v529 = vsub.f32 1.0, %v519
    %v530 = vsub.f32 1.0, %v521
    %v531 = vsub.f32 1.0, %v523
    %532 = vst [vmem:[#allocation12] sm:$0xff] %v524
    %533 = vst [vmem:[#allocation12 + $0x8] sm:$0xff] %v525
    %534 = vst [vmem:[#allocation12 + $0x10] sm:$0xff] %v526
    %535 = vst [vmem:[#allocation12 + $0x18] sm:$0xff] %v527
    %536 = vst [vmem:[#allocation12 + $0x20] sm:$0xff] %v528
    %537 = vst [vmem:[#allocation12 + $0x28] sm:$0xff] %v529
    %538 = vst [vmem:[#allocation12 + $0x30] sm:$0xff] %v530
    %539 = vst [vmem:[#allocation12 + $0x38] sm:$0xff] %v531
    %s540 = scalar_lea.vmem [#allocation12], 64
    %541 = vst [vmem:[%s540] sm:$0xff] %v509
    %542 = vst [vmem:[%s540 + $0x8] sm:$0xff] %v511
    %543 = vst [vmem:[%s540 + $0x10] sm:$0xff] %v513
    %544 = vst [vmem:[%s540 + $0x18] sm:$0xff] %v515
    %545 = vst [vmem:[%s540 + $0x20] sm:$0xff] %v517
    %546 = vst [vmem:[%s540 + $0x28] sm:$0xff] %v519
    %547 = vst [vmem:[%s540 + $0x30] sm:$0xff] %v521
    %548 = vst [vmem:[%s540 + $0x38] sm:$0xff] %v523
    // Predicated region
    $region42: #{tpu_custom_call.1} parent=1 // pred_check
      _
    $region43: #{tpu_custom_call.1} parent=1 // pred_check_branch
      %550 = sbr.rel (0) target = $region45
    $region44: #{tpu_custom_call.1} parent=1 // pred_region
      %s552 = ssub.s32 2048, 2048
      %553 = vsyncadd [#allocation4], %s552
      %s554 = sshll.u32 [#allocation12], 4
      %s555 = int_to_ptr.vmem [resolvable:$true] %s554
      %560 = dma.vmem_to_hbm [thread:$0]  %s555, 2048, %s5, [#allocation4], 1024, 1024, 64
    $region45: #{tpu_custom_call.1} parent=1 // pred_fallthru
      _
    // Predicated region
    $region46: #{tpu_custom_call.1} parent=1 // pred_check
      _
    $region47: #{tpu_custom_call.1} parent=1 // pred_check_branch
      %562 = sbr.rel (0) target = $region49
    $region48: #{tpu_custom_call.1} parent=1 // pred_region
      %563 = dma.done [#allocation4], 2048
    $region49: #{tpu_custom_call.1} parent=1 // pred_fallthru
      _
    %564 = vsyncpa [#allocation3], 1
    %565 = vsyncpa [#allocation4], 1
    %566 = vsyncpa [#allocation5], 1
    %567 = vsyncpa [#allocation6], 1
    %568 = vsyncpa [#allocation9], 1

</llo_original>
